<compile_context>
chip_gen: v7x
topology: tpu7x:2x2x1
jax: 0.10.0
libtpu: 0.0.40
codegen_flags: <defaults>
</compile_context>

<pallas_src>
import jax
import jax.numpy as jnp
from jax.experimental import pallas as pl
from jax.experimental.pallas import tpu as pltpu


def _dma_copy_kernel(x_hbm_ref, o_hbm_ref, sem):
    # One descriptor, bounded only by HBM bandwidth: no grid bookkeeping,
    # no VMEM staging, no vld/vst on the vector units.
    cp = pltpu.make_async_copy(x_hbm_ref, o_hbm_ref, sem)
    cp.start()
    cp.wait()


def _device_identity_copy(embedding):
    """Debug/exercise path: copy `embedding` with a single HBM->HBM DMA."""
    return pl.pallas_call(
        _dma_copy_kernel,
        out_shape=jax.ShapeDtypeStruct(embedding.shape, embedding.dtype),
        in_specs=[pl.BlockSpec(memory_space=pl.ANY)],
        out_specs=pl.BlockSpec(memory_space=pl.ANY),
        scratch_shapes=[pltpu.SemaphoreType.DMA(())],
    )(embedding)


def fusion_forward(embedding, profile, *, exercise_kernel=False):
    """Mirrors Fusion.forward: returns `embedding` unchanged.

    `profile` is accepted for signature parity but unused, exactly like the
    reference module.  The default (hot) path performs no device work at all;
    set `exercise_kernel=True` only to run the Pallas DMA-copy kernel.
    """
    del profile  # unused in the reference forward pass
    if exercise_kernel:
        return _device_identity_copy(embedding)
    return embedding


def init_params(key, embed_dim, profile_dim, dtype=jnp.float32):
    """Parameters matching the nn.Linear shapes in __init__ (PyTorch layout:
    weight is (out_features, in_features)).  Unused by forward(); kept only
    for structural fidelity with the reference module."""
    k1, k2, k3, k4, k5, k6 = jax.random.split(key, 6)
    return {
        "w_1": {  # nn.Linear(embed_dim * 2, embed_dim)
            "weight": jax.random.normal(k1, (embed_dim, embed_dim * 2), dtype) * 0.02,
            "bias": jax.random.normal(k2, (embed_dim,), dtype) * 0.02,
        },
        "w_2": {  # nn.Linear(embed_dim, embed_dim)
            "weight": jax.random.normal(k3, (embed_dim, embed_dim), dtype) * 0.02,
            "bias": jax.random.normal(k4, (embed_dim,), dtype) * 0.02,
        },
        "linear": {  # nn.Linear(profile_dim, embed_dim)
            "weight": jax.random.normal(k5, (embed_dim, profile_dim), dtype) * 0.02,
            "bias": jax.random.normal(k6, (embed_dim,), dtype) * 0.02,
        },
    }


if __name__ == "__main__":
    embed_dim = 32
    profile_dim = 16
    batch = 8

    key = jax.random.PRNGKey(0)
    k_emb, k_prof, k_params = jax.random.split(key, 3)

    embedding = jax.random.normal(k_emb, (batch, embed_dim), jnp.float32)
    profile = jax.random.normal(k_prof, (batch, profile_dim), jnp.float32)
    params = init_params(k_params, embed_dim, profile_dim)  # unused by forward

    # Hot path: pure identity, no device op.
    out_fast = fusion_forward(embedding, profile)
    assert out_fast.shape == embedding.shape
    assert out_fast.dtype == embedding.dtype
    assert bool(jnp.all(out_fast == embedding))

    # Exercise the Pallas DMA-copy kernel once.
    out = fusion_forward(embedding, profile, exercise_kernel=True)
    out = jax.block_until_ready(out)

    assert out.shape == embedding.shape
    assert out.dtype == embedding.dtype
    assert bool(jnp.all(out == embedding))

    print("KERNEL_OK")
</pallas_src>

<mosaic_0001>
module attributes {stable_mosaic.version = 11 : i64} {
  func.func @_dma_copy_kernel(%arg0: memref<8x32xf32, #tpu.memory_space<any>>, %arg1: memref<8x32xf32, #tpu.memory_space<any>>, %arg2: memref<!tpu.dma_semaphore, #tpu.memory_space<semaphore_mem>>) attributes {dimension_semantics = [], scalar_prefetch = 0 : i64, scratch_operands = 1 : i64, tpu.core_type = #tpu.core_type<tc>} {
    tpu.enqueue_dma source(%arg0 : memref<8x32xf32, #tpu.memory_space<any>>) target(%arg1 : memref<8x32xf32, #tpu.memory_space<any>>) target_semaphore(%arg2 : memref<!tpu.dma_semaphore, #tpu.memory_space<semaphore_mem>>)
    tpu.wait_dma2 semaphore(%arg2 : memref<!tpu.dma_semaphore, #tpu.memory_space<semaphore_mem>>) src(%arg0 : memref<8x32xf32, #tpu.memory_space<any>>) dst(%arg1 : memref<8x32xf32, #tpu.memory_space<any>>)
    return
  }
}

</mosaic_0001>

<llo_original>
// kernel: tpu_custom_call.1
$region0: #{tpu_custom_call.1}
  #allocation0 [shape = 'u32[]', space=smem, size = 0x4, offset = 0x4, fixed_abs, tag = 'smem constant byte address 0x4 - core index']
  #allocation1 [shape = 'u32[144,128]{1,0:T(1,128)}', space=vmem, size = 0x12000, scoped, tag = 'internal scratch']
  #allocation2 [shape = 's32[1]{0}', space=sflag, size = 0x4, scoped, tag = 'scratch operand']
  #allocation3 [shape = 's32[]', space=sflag, size = 0x4, offset = 0, fixed_abs, tag = 'sflag constant byte address 0x0 - dummy sync flag']
  #allocation4 [shape = 'u32[0]{0}', space=smem, size = 0, offset = 0, fixed_abs, tag = 'smem constant byte address 0x0 - null']
  %s0 = inlined_call_operand.hbm [shape: f32[8,32], index: 0, kind: input, shape index: {}]
  %s1 = inlined_call_operand.hbm [shape: f32[8,32], index: 1, kind: output, shape index: {}]
  %s2 = sld [smem:[#allocation0]]
  $region2: #{tpu_custom_call.1} parent=0
    _
  %s4 = ssub.s32 1, %s2
  %s5 = scalar_select 0, %s4, %s2
  %s7 = sshll.u32 1, 14
  %s8 = sxor.u32 4294967295, %s7
  %s11 = sshll.u32 3, 24
  %s12 = sxor.u32 4294967295, %s11
  %s13 = sand.u32 0, %s12
  %s15 = sor.u32 %s13, 0
  %18 = dma.general %s0, 128, %s1, [#allocation2], [#allocation3], [#allocation4], %s15, 0
  %s19 = smul.u32 8, 1
  %s20 = sshll.u32 %s19, 4
  %21 = dma.done [#allocation2], %s20
  %22 = vsyncmov [#allocation2]
  %s23 = vpop.sfrf %22
  %p24 = scmp.eq.s32.totalorder %s23, 0
  %p25 = pneg %p24
  %27 = shalt.err (%p25)

</llo_original>
